<compile_context>
chip_gen: v5e
topology: v5e:2x2
jax: 0.10.0
libtpu: 0.0.40
codegen_flags: <defaults>
</compile_context>

<pallas_src>
import math

import jax
import jax.numpy as jnp
from jax.experimental import pallas as pl
from jax.experimental.pallas import tpu as pltpu

LANE = 128


def _round_up(n, m):
    return ((n + m - 1) // m) * m


# ---------------------------------------------------------------------------
# GRU layer kernel: grid over time, hidden state carried in VMEM scratch.
# ---------------------------------------------------------------------------
def _gru_layer_kernel(x_ref, wi_ref, wh_ref, bi_ref, bh_ref, out_ref, h_scr):
    # x_ref : (1, B, Din)     wi_ref: (Din, 3*Hp)   wh_ref: (Hp, 3*Hp)
    # bi_ref: (1, 3*Hp)       bh_ref: (1, 3*Hp)
    # out_ref: (1, B, Hp)     h_scr : (B, Hp) f32 scratch (persistent)
    t = pl.program_id(0)

    @pl.when(t == 0)
    def _():
        h_scr[...] = jnp.zeros_like(h_scr)

    hp = h_scr.shape[-1]
    x = x_ref[0]                      # (B, Din)
    h = h_scr[...]                    # (B, Hp)

    # Gate pre-activations; torch gate order (r, z, n), weights pre-transposed
    # in the wrapper so no in-kernel .T is needed.
    gx = jnp.dot(x, wi_ref[...], preferred_element_type=jnp.float32) + bi_ref[...]
    gh = jnp.dot(h, wh_ref[...], preferred_element_type=jnp.float32) + bh_ref[...]

    r = jax.nn.sigmoid(gx[:, 0 * hp:1 * hp] + gh[:, 0 * hp:1 * hp])
    z = jax.nn.sigmoid(gx[:, 1 * hp:2 * hp] + gh[:, 1 * hp:2 * hp])
    n = jnp.tanh(gx[:, 2 * hp:3 * hp] + r * gh[:, 2 * hp:3 * hp])
    h_new = (1.0 - z) * n + z * h

    h_scr[...] = h_new
    out_ref[0] = h_new


def _gru_layer(x_sbd, wi_t, wh_t, bi, bh):
    """x_sbd: (S, B, Din) f32 -> (S, B, Hp) f32 (all timestep outputs)."""
    S, B, Din = x_sbd.shape
    Hp = wh_t.shape[0]
    return pl.pallas_call(
        _gru_layer_kernel,
        out_shape=jax.ShapeDtypeStruct((S, B, Hp), jnp.float32),
        grid=(S,),
        in_specs=[
            pl.BlockSpec((1, B, Din), lambda t: (t, 0, 0)),      # x_t slab
            pl.BlockSpec((Din, 3 * Hp), lambda t: (0, 0)),       # VMEM-resident
            pl.BlockSpec((Hp, 3 * Hp), lambda t: (0, 0)),        # VMEM-resident
            pl.BlockSpec((1, 3 * Hp), lambda t: (0, 0)),
            pl.BlockSpec((1, 3 * Hp), lambda t: (0, 0)),
        ],
        out_specs=pl.BlockSpec((1, B, Hp), lambda t: (t, 0, 0)),
        scratch_shapes=[pltpu.VMEM((B, Hp), jnp.float32)],
        compiler_params=pltpu.CompilerParams(
            # The time axis is a carried recurrence -> must be sequential.
            dimension_semantics=("arbitrary",)),
    )(x_sbd, wi_t, wh_t, bi, bh)


# ---------------------------------------------------------------------------
# Fused head kernel: fc2(squeeze(fc1(x))) folded into ONE matmul + bias.
# ---------------------------------------------------------------------------
def _fused_head_kernel(x_ref, m_ref, c_ref, out_ref):
    # x_ref: (B, P*Hp)   m_ref: (P*Hp, O)   c_ref: (1, O)   out_ref: (B, O)
    out_ref[...] = (
        jnp.dot(x_ref[...], m_ref[...], preferred_element_type=jnp.float32)
        + c_ref[...]
    ).astype(out_ref.dtype)


def _fused_head(x_flat, m, c):
    B = x_flat.shape[0]
    O = m.shape[1]
    return pl.pallas_call(
        _fused_head_kernel,
        out_shape=jax.ShapeDtypeStruct((B, O), jnp.float32),
        in_specs=[
            pl.BlockSpec(memory_space=pltpu.VMEM),
            pl.BlockSpec(memory_space=pltpu.VMEM),
            pl.BlockSpec(memory_space=pltpu.VMEM),
        ],
        out_specs=pl.BlockSpec(memory_space=pltpu.VMEM),
    )(x_flat, m, c)


# ---------------------------------------------------------------------------
# Parameter prep (wrapper-side, one-time): pre-transpose, gate-concat, pad.
# ---------------------------------------------------------------------------
def _prep_gru_layer_params(w_ih, w_hh, b_ih, b_hh, hidden_dim, hp, din_p):
    """torch GRU layer params -> padded, pre-transposed, gate-concatenated."""
    din = w_ih.shape[1]          # real (unpadded) input width of this layer
    h = hidden_dim
    wi_t = jnp.zeros((din_p, 3 * hp), jnp.float32)
    wh_t = jnp.zeros((hp, 3 * hp), jnp.float32)
    bi = jnp.zeros((1, 3 * hp), jnp.float32)
    bh = jnp.zeros((1, 3 * hp), jnp.float32)
    for g in range(3):           # gate order (r, z, n) as in torch.nn.GRU
        wi_t = wi_t.at[:din, g * hp:g * hp + h].set(w_ih[g * h:(g + 1) * h, :].T)
        wh_t = wh_t.at[:h, g * hp:g * hp + h].set(w_hh[g * h:(g + 1) * h, :].T)
        bi = bi.at[0, g * hp:g * hp + h].set(b_ih[g * h:(g + 1) * h])
        bh = bh.at[0, g * hp:g * hp + h].set(b_hh[g * h:(g + 1) * h])
    return wi_t, wh_t, bi, bh


def rnn_decoder_forward(x, gru_params, fc1_w, fc1_b, fc2_w, fc2_b, steps_ahead):
    """x: (B, S, input_dim) f32 -> (B, output_dim) f32."""
    B, S, input_dim = x.shape
    hidden_dim = gru_params[0]["w_hh"].shape[1]
    hp = _round_up(hidden_dim, LANE)
    out_dim = fc2_w.shape[0]
    p = steps_ahead

    # (B, S, D) -> (S, B, D): blocked axis leading, lane axis last.
    # Layout plumbing done once in the wrapper, never inside the kernel.
    h_seq = jnp.transpose(x.astype(jnp.float32), (1, 0, 2))

    din_p = input_dim
    for layer in gru_params:
        wi_t, wh_t, bi, bh = _prep_gru_layer_params(
            layer["w_ih"], layer["w_hh"], layer["b_ih"], layer["b_hh"],
            hidden_dim, hp, din_p)
        h_seq = _gru_layer(h_seq, wi_t, wh_t, bi, bh)     # (S, B, Hp)
        din_p = hp
        # TODO(synk): training-mode inter-layer dropout (p=0.1) omitted —
        # this implements the eval/inference forward semantics.

    # Last `steps_ahead` timesteps flattened into a lane-dense (B, P*Hp) slab.
    tail = h_seq[S - p:]                                  # (P, B, Hp)
    x_flat = jnp.transpose(tail, (1, 0, 2)).reshape(B, p * hp)

    # Algebraic fusion of fc1 (H -> 1) and fc2 (P -> O):
    #   out[b,o] = sum_s (h[b,s,:]·w1 + b1) * W2[o,s] + b2[o]
    #            = x_flat[b,:] @ M[:,o] + c[o]
    w1 = fc1_w.reshape(-1).astype(jnp.float32)            # (H,)
    w1p = jnp.zeros((hp,), jnp.float32).at[:hidden_dim].set(w1)
    m = (fc2_w.astype(jnp.float32).T[:, None, :] * w1p[None, :, None]
         ).reshape(p * hp, out_dim)
    c = (fc1_b[0] * jnp.sum(fc2_w, axis=1) + fc2_b).reshape(1, out_dim)

    return _fused_head(x_flat, m, c.astype(jnp.float32))


# ---------------------------------------------------------------------------
# Pure-JAX reference (matches torch.nn.GRU / Linear semantics, eval mode).
# ---------------------------------------------------------------------------
def _reference(x, gru_params, fc1_w, fc1_b, fc2_w, fc2_b, steps_ahead):
    hi = jax.lax.Precision.HIGHEST
    B, S, _ = x.shape
    h_seq = x.astype(jnp.float32)
    for layer in gru_params:
        w_ih, w_hh = layer["w_ih"], layer["w_hh"]
        b_ih, b_hh = layer["b_ih"], layer["b_hh"]
        hdim = w_hh.shape[1]
        h = jnp.zeros((B, hdim), jnp.float32)
        outs = []
        for t in range(S):
            xt = h_seq[:, t, :]
            gi = jnp.dot(xt, w_ih.T, precision=hi) + b_ih
            gh = jnp.dot(h, w_hh.T, precision=hi) + b_hh
            i_r, i_z, i_n = jnp.split(gi, 3, axis=-1)
            h_r, h_z, h_n = jnp.split(gh, 3, axis=-1)
            r = jax.nn.sigmoid(i_r + h_r)
            z = jax.nn.sigmoid(i_z + h_z)
            n = jnp.tanh(i_n + r * h_n)
            h = (1.0 - z) * n + z * h
            outs.append(h)
        h_seq = jnp.stack(outs, axis=1)                    # (B, S, H)
    y = h_seq[:, -steps_ahead:, :]                         # (B, P, H)
    y1 = jnp.einsum("bph,oh->bpo", y, fc1_w, precision=hi) + fc1_b
    y1 = y1[:, :, 0]                                       # (B, P)
    return jnp.dot(y1, fc2_w.T, precision=hi) + fc2_b      # (B, O)


if __name__ == "__main__":
    # Small shapes consistent with the module's forward.
    input_dim, hidden_dim, num_layers = 8, 32, 2
    steps_ahead, output_dim = 4, 4
    B, S = 2, 8

    key = jax.random.PRNGKey(0)
    keys = jax.random.split(key, 4 * num_layers + 5)
    bound = 1.0 / math.sqrt(hidden_dim)

    gru_params = []
    k = 0
    din = input_dim
    for _ in range(num_layers):
        w_ih = jax.random.uniform(keys[k + 0], (3 * hidden_dim, din),
                                  minval=-bound, maxval=bound, dtype=jnp.float32)
        w_hh = jax.random.uniform(keys[k + 1], (3 * hidden_dim, hidden_dim),
                                  minval=-bound, maxval=bound, dtype=jnp.float32)
        b_ih = jax.random.uniform(keys[k + 2], (3 * hidden_dim,),
                                  minval=-bound, maxval=bound, dtype=jnp.float32)
        b_hh = jax.random.uniform(keys[k + 3], (3 * hidden_dim,),
                                  minval=-bound, maxval=bound, dtype=jnp.float32)
        gru_params.append({"w_ih": w_ih, "w_hh": w_hh, "b_ih": b_ih, "b_hh": b_hh})
        k += 4
        din = hidden_dim

    fc1_w = jax.random.uniform(keys[k + 0], (1, hidden_dim),
                               minval=-bound, maxval=bound, dtype=jnp.float32)
    fc1_b = jax.random.uniform(keys[k + 1], (1,),
                               minval=-bound, maxval=bound, dtype=jnp.float32)
    bound2 = 1.0 / math.sqrt(steps_ahead)
    fc2_w = jax.random.uniform(keys[k + 2], (output_dim, steps_ahead),
                               minval=-bound2, maxval=bound2, dtype=jnp.float32)
    fc2_b = jax.random.uniform(keys[k + 3], (output_dim,),
                               minval=-bound2, maxval=bound2, dtype=jnp.float32)

    x = jax.random.normal(keys[k + 4], (B, S, input_dim), dtype=jnp.float32)

    out = rnn_decoder_forward(x, gru_params, fc1_w, fc1_b, fc2_w, fc2_b,
                              steps_ahead)
    out = jax.block_until_ready(out)

    ref = _reference(x, gru_params, fc1_w, fc1_b, fc2_w, fc2_b, steps_ahead)
    assert out.shape == (B, output_dim)
    max_diff = float(jnp.max(jnp.abs(out - ref)))
    assert jnp.allclose(out, ref, atol=5e-3, rtol=5e-3), (
        f"mismatch vs reference: max abs diff {max_diff}")

    print("KERNEL_OK")
</pallas_src>

<mosaic_0001>
module attributes {stable_mosaic.version = 11 : i64} {
  func.func @_gru_layer_kernel(%arg0: i32, %arg1: memref<1x2x8xf32, #tpu.memory_space<vmem>>, %arg2: memref<8x384xf32, #tpu.memory_space<vmem>>, %arg3: memref<128x384xf32, #tpu.memory_space<vmem>>, %arg4: memref<1x384xf32, #tpu.memory_space<vmem>>, %arg5: memref<1x384xf32, #tpu.memory_space<vmem>>, %arg6: memref<1x2x128xf32, #tpu.memory_space<vmem>>, %arg7: memref<2x128xf32, #tpu.memory_space<vmem>>) attributes {dimension_semantics = [#tpu.dimension_semantics<arbitrary>], iteration_bounds = array<i64: 8>, scalar_prefetch = 0 : i64, scratch_operands = 1 : i64, tpu.core_type = #tpu.core_type<tc>, window_params = [{transform_indices = @transform_0, window_bounds = array<i64: 1, 2, 8>}, {pipeline_mode = #tpu.pipeline_mode<synchronous>, transform_indices = @transform_1, window_bounds = array<i64: 8, 384>}, {pipeline_mode = #tpu.pipeline_mode<synchronous>, transform_indices = @transform_2, window_bounds = array<i64: 128, 384>}, {pipeline_mode = #tpu.pipeline_mode<synchronous>, transform_indices = @transform_3, window_bounds = array<i64: 1, 384>}, {pipeline_mode = #tpu.pipeline_mode<synchronous>, transform_indices = @transform_4, window_bounds = array<i64: 1, 384>}, {transform_indices = @transform_5, window_bounds = array<i64: 1, 2, 128>}]} {
    %c0_i32 = arith.constant 0 : i32
    %0 = arith.cmpi eq, %arg0, %c0_i32 : i32
    %1 = arith.extui %0 : i1 to i32
    %c0_i32_0 = arith.constant 0 : i32
    %2 = arith.cmpi ne, %1, %c0_i32_0 : i32
    scf.if %2 {
      %cst_22 = arith.constant 0.000000e+00 : f32
      %46 = vector.broadcast %cst_22 : f32 to vector<2x128xf32>
      %c0_23 = arith.constant 0 : index
      %c0_24 = arith.constant 0 : index
      %47 = vector.load %arg7[%c0_23, %c0_24] : memref<2x128xf32, #tpu.memory_space<vmem>>, vector<2x128xf32>
      tpu.vector_store %arg7[%c0_23, %c0_24], %46 {strides = array<i32>} : memref<2x128xf32, #tpu.memory_space<vmem>>, vector<2x128xf32>,
    } else {
    }
    %c0 = arith.constant 0 : index
    %c0_1 = arith.constant 0 : index
    %c0_2 = arith.constant 0 : index
    %3 = vector.load %arg1[%c0, %c0_1, %c0_2] : memref<1x2x8xf32, #tpu.memory_space<vmem>>, vector<1x2x8xf32>
    %4 = vector.shape_cast %3 : vector<1x2x8xf32> to vector<2x8xf32>
    %c0_3 = arith.constant 0 : index
    %c0_4 = arith.constant 0 : index
    %5 = vector.load %arg7[%c0_3, %c0_4] : memref<2x128xf32, #tpu.memory_space<vmem>>, vector<2x128xf32>
    %c0_5 = arith.constant 0 : index
    %c0_6 = arith.constant 0 : index
    %6 = vector.load %arg2[%c0_5, %c0_6] : memref<8x384xf32, #tpu.memory_space<vmem>>, vector<8x384xf32>
    %cst = arith.constant dense<0.000000e+00> : vector<2x384xf32>
    %7 = tpu.matmul %4, %6, %cst {dimension_numbers = #tpu.dot_dimension_numbers<[1], [0], [0], [1], [0, 0, 1, 1], [], []>} : vector<2x8xf32>, vector<8x384xf32>, vector<2x384xf32> -> vector<2x384xf32>
    %c0_7 = arith.constant 0 : index
    %c0_8 = arith.constant 0 : index
    %8 = vector.load %arg4[%c0_7, %c0_8] : memref<1x384xf32, #tpu.memory_space<vmem>>, vector<1x384xf32>
    %9 = vector.broadcast %8 : vector<1x384xf32> to vector<2x384xf32>
    %10 = arith.addf %7, %9 : vector<2x384xf32>
    %c0_9 = arith.constant 0 : index
    %c0_10 = arith.constant 0 : index
    %11 = vector.load %arg3[%c0_9, %c0_10] : memref<128x384xf32, #tpu.memory_space<vmem>>, vector<128x384xf32>
    %cst_11 = arith.constant dense<0.000000e+00> : vector<2x384xf32>
    %12 = tpu.matmul %5, %11, %cst_11 {dimension_numbers = #tpu.dot_dimension_numbers<[1], [0], [0], [1], [0, 0, 1, 1], [], []>} : vector<2x128xf32>, vector<128x384xf32>, vector<2x384xf32> -> vector<2x384xf32>
    %c0_12 = arith.constant 0 : index
    %c0_13 = arith.constant 0 : index
    %13 = vector.load %arg5[%c0_12, %c0_13] : memref<1x384xf32, #tpu.memory_space<vmem>>, vector<1x384xf32>
    %14 = vector.broadcast %13 : vector<1x384xf32> to vector<2x384xf32>
    %15 = arith.addf %12, %14 : vector<2x384xf32>
    %16 = vector.extract_strided_slice %10 {offsets = [0, 0], sizes = [2, 128], strides = [1, 1]} : vector<2x384xf32> to vector<2x128xf32>
    %17 = vector.extract_strided_slice %15 {offsets = [0, 0], sizes = [2, 128], strides = [1, 1]} : vector<2x384xf32> to vector<2x128xf32>
    %18 = arith.addf %16, %17 : vector<2x128xf32>
    %19 = arith.negf %18 : vector<2x128xf32>
    %20 = math.exp %19 : vector<2x128xf32>
    %cst_14 = arith.constant 1.000000e+00 : f32
    %21 = vector.broadcast %cst_14 : f32 to vector<2x128xf32>
    %22 = arith.addf %21, %20 : vector<2x128xf32>
    %23 = arith.divf %21, %22 : vector<2x128xf32>
    %24 = vector.extract_strided_slice %10 {offsets = [0, 128], sizes = [2, 128], strides = [1, 1]} : vector<2x384xf32> to vector<2x128xf32>
    %25 = vector.extract_strided_slice %15 {offsets = [0, 128], sizes = [2, 128], strides = [1, 1]} : vector<2x384xf32> to vector<2x128xf32>
    %26 = arith.addf %24, %25 : vector<2x128xf32>
    %27 = arith.negf %26 : vector<2x128xf32>
    %28 = math.exp %27 : vector<2x128xf32>
    %cst_15 = arith.constant 1.000000e+00 : f32
    %29 = vector.broadcast %cst_15 : f32 to vector<2x128xf32>
    %30 = arith.addf %29, %28 : vector<2x128xf32>
    %31 = arith.divf %29, %30 : vector<2x128xf32>
    %32 = vector.extract_strided_slice %10 {offsets = [0, 256], sizes = [2, 128], strides = [1, 1]} : vector<2x384xf32> to vector<2x128xf32>
    %33 = vector.extract_strided_slice %15 {offsets = [0, 256], sizes = [2, 128], strides = [1, 1]} : vector<2x384xf32> to vector<2x128xf32>
    %34 = arith.mulf %23, %33 : vector<2x128xf32>
    %35 = arith.addf %32, %34 : vector<2x128xf32>
    %36 = math.tanh %35 : vector<2x128xf32>
    %cst_16 = arith.constant 1.000000e+00 : f32
    %37 = vector.broadcast %cst_16 : f32 to vector<2x128xf32>
    %38 = arith.subf %37, %31 : vector<2x128xf32>
    %39 = arith.mulf %38, %36 : vector<2x128xf32>
    %40 = arith.mulf %31, %5 : vector<2x128xf32>
    %41 = arith.addf %39, %40 : vector<2x128xf32>
    %c0_17 = arith.constant 0 : index
    %c0_18 = arith.constant 0 : index
    %42 = vector.load %arg7[%c0_17, %c0_18] : memref<2x128xf32, #tpu.memory_space<vmem>>, vector<2x128xf32>
    tpu.vector_store %arg7[%c0_17, %c0_18], %41 {strides = array<i32>} : memref<2x128xf32, #tpu.memory_space<vmem>>, vector<2x128xf32>,
    %c0_19 = arith.constant 0 : index
    %c0_20 = arith.constant 0 : index
    %c0_21 = arith.constant 0 : index
    %43 = vector.load %arg6[%c0_19, %c0_20, %c0_21] : memref<1x2x128xf32, #tpu.memory_space<vmem>>, vector<1x2x128xf32>
    %44 = vector.shape_cast %43 : vector<1x2x128xf32> to vector<2x128xf32>
    %45 = vector.shape_cast %41 : vector<2x128xf32> to vector<1x2x128xf32>
    tpu.vector_store %arg6[%c0_19, %c0_20, %c0_21], %45 {strides = array<i32>} : memref<1x2x128xf32, #tpu.memory_space<vmem>>, vector<1x2x128xf32>,
    return
  }
  func.func @transform_0(%arg0: i32) -> (i32, i32, i32) {
    %c0_i32 = arith.constant 0 : i32
    %c0_i32_0 = arith.constant 0 : i32
    %c0_i32_1 = arith.constant 0 : i32
    return %arg0, %c0_i32, %c0_i32_0 : i32, i32, i32
  }
  func.func @transform_1(%arg0: i32) -> (i32, i32) {
    %c0_i32 = arith.constant 0 : i32
    %c0_i32_0 = arith.constant 0 : i32
    %c0_i32_1 = arith.constant 0 : i32
    return %c0_i32, %c0_i32_0 : i32, i32
  }
  func.func @transform_2(%arg0: i32) -> (i32, i32) {
    %c0_i32 = arith.constant 0 : i32
    %c0_i32_0 = arith.constant 0 : i32
    %c0_i32_1 = arith.constant 0 : i32
    return %c0_i32, %c0_i32_0 : i32, i32
  }
  func.func @transform_3(%arg0: i32) -> (i32, i32) {
    %c0_i32 = arith.constant 0 : i32
    %c0_i32_0 = arith.constant 0 : i32
    %c0_i32_1 = arith.constant 0 : i32
    return %c0_i32, %c0_i32_0 : i32, i32
  }
  func.func @transform_4(%arg0: i32) -> (i32, i32) {
    %c0_i32 = arith.constant 0 : i32
    %c0_i32_0 = arith.constant 0 : i32
    %c0_i32_1 = arith.constant 0 : i32
    return %c0_i32, %c0_i32_0 : i32, i32
  }
  func.func @transform_5(%arg0: i32) -> (i32, i32, i32) {
    %c0_i32 = arith.constant 0 : i32
    %c0_i32_0 = arith.constant 0 : i32
    %c0_i32_1 = arith.constant 0 : i32
    return %arg0, %c0_i32, %c0_i32_0 : i32, i32, i32
  }
}

</mosaic_0001>

<llo_original>
// kernel: tpu_custom_call.1
$region0: #{tpu_custom_call.1}
  #allocation0 [shape = 'u32[]', space=smem, size = 0x4, offset = 0x4, fixed_abs, tag = 'smem constant byte address 0x4 - core index']
  #allocation1 [shape = 'u32[72,128]{1,0:T(1,128)}', space=vmem, size = 0x9000, scoped, tag = 'internal scratch']
  #allocation2 [shape = 'f32[2,128]{1,0:T(2,128)}', space=vmem, size = 0x400, scoped, tag = 'scratch operand']
  %s0 = inlined_call_operand.hbm [shape: f32[8,2,8], index: 0, kind: input, shape index: {}]
  %s1 = inlined_call_operand.hbm [shape: f32[8,384], index: 1, kind: input, shape index: {}]
  %s2 = inlined_call_operand.hbm [shape: f32[128,384], index: 2, kind: input, shape index: {}]
  %s3 = inlined_call_operand.hbm [shape: f32[1,384], index: 3, kind: input, shape index: {}]
  %s4 = inlined_call_operand.vmem [shape: f32[1,384], index: 4, kind: input, shape index: {}]
  %s5 = inlined_call_operand.hbm [shape: f32[8,2,128], index: 5, kind: output, shape index: {}]
  %s6 = sld [smem:[#allocation0]]
  $region73: #{tpu_custom_call.1} parent=0
    _
  %s8 = ssub.s32 1, %s6
  %s9 = scalar_select 0, %s8, %s6
  $region1: #{tpu_custom_call.1} parent=0
    #allocation3 [shape = 'u8[2048]{0}', space=vmem, size = 0x800, scoped, tag = 'input window, operand 0']
    #allocation4 [shape = 's32[2]{0}', space=sflag, size = 0x8, scoped, tag = 'scoped memory for tpu_custom_call.1']
    #allocation5 [shape = 's32[2]{0}', space=sflag, size = 0x8, scoped, tag = 'scoped memory for tpu_custom_call.1']
    #allocation6 [shape = 'u8[12288]{0}', space=vmem, size = 0x3000, scoped, tag = 'input window, operand 1, single buffered']
    #allocation7 [shape = 's32[1]{0}', space=sflag, size = 0x4, scoped, tag = 'scoped memory for tpu_custom_call.1']
    #allocation8 [shape = 'u8[196608]{0}', space=vmem, size = 0x30000, scoped, tag = 'input window, operand 2, single buffered']
    #allocation9 [shape = 'u8[1536]{0}', space=vmem, size = 0x800, scoped, tag = 'input window, operand 3, single buffered']
    #allocation10 [shape = 's32[1]{0}', space=sflag, size = 0x4, scoped, tag = 'scoped memory for tpu_custom_call.1']
    #allocation11 [shape = 'u8[2048]{0}', space=vmem, size = 0x800, scoped, tag = 'output window, operand 0']
    %10 = vsyncpa [#allocation4], 0
    %s11 = scalar_lea.sflag [#allocation4], 1
    %12 = vsyncpa %s11, 0
    %13 = vsyncpa [#allocation7], 0
    %14 = vsyncpa [#allocation10], 0
    %15 = vsyncpa [#allocation5], 0
    %s16 = scalar_lea.sflag [#allocation5], 1
    %17 = vsyncpa %s16, 0
    loop: start=0, step=1, limit=10
    $region2: #{tpu_custom_call.1} parent=1 // loop_pre_header
      _
    $region3: #{tpu_custom_call.1} parent=1 // loop_header
      %s19 = sphi 0, %s23
      %p20 = scmp.ge.s32.totalorder %s19, 10
      %s29 = sphi 0, %s31
      %s32 = sphi 0, %s29
      %s33 = sphi 0, %s32
      %s49 = sphi 0, %s33
      %s53 = sphi 0, %s53
      %s55 = sphi 0, %s53
      %s56 = sphi 0, %s55
      %s70 = sphi 0, %s56
      %s74 = sphi 0, %s74
      %s76 = sphi 0, %s74
      %s77 = sphi 0, %s76
      %s91 = sphi 0, %s77
      %s95 = sphi 0, %s95
      %s97 = sphi 0, %s95
      %s98 = sphi 0, %s97
      %s112 = sphi 0, %s98
      %s116 = sphi 0, %s116
      %s118 = sphi 0, %s116
      %s119 = sphi 0, %s118
      %s133 = sphi 0, %s119
      %s139 = sphi 0, %s141
      %s142 = sphi 0, %s139
      %s143 = sphi 0, %s142
      %s159 = sphi 0, %s143
    $region4: #{tpu_custom_call.1} parent=1 // loop_header_branch
      %22 = sbr.rel (%p20) target = $region8
    $region5: #{tpu_custom_call.1} parent=1 // loop_body
      %s24 = ssub.s32 %s19, 1
      %s25 = ssub.s32 %s19, 2
      %s26 = sadd.s32 %s19, 1
      %s27 = ssub.s32 %s19, %s26
      %p28 = scmp.eq.s32.totalorder %s27, 0
      %s30 = sadd.s32 %s29, 1
      %s31 = scalar_select %p28, %s29, %s30
      %p34 = pneg %p28
      %p35 = scmp.eq.s32.totalorder %s19, 7
      %p36 = por %p34, %p35
      %p37 = scmp.ne.s32.totalorder %s29, %s32
      %p38 = scmp.eq.s32.totalorder %s19, 0
      %p39 = por %p37, %p38
      %p40 = scmp.ne.s32.totalorder %s29, %s32
      %p41 = scmp.eq.s32.totalorder %s24, 7
      %p42 = por %p40, %p41
      %p43 = scmp.ne.s32.totalorder %s32, %s33
      %p44 = scmp.eq.s32.totalorder %s24, 0
      %p45 = por %p43, %p44
      %p46 = scmp.ne.s32.totalorder %s32, %s33
      %p47 = scmp.eq.s32.totalorder %s25, 7
      %p48 = por %p46, %p47
      %p50 = scmp.ne.s32.totalorder %s33, %s49
      %p51 = scmp.eq.s32.totalorder %s25, 0
      %p52 = por %p50, %p51
      %s54 = sadd.s32 %s53, 1
      %p57 = scmp.eq.s32.totalorder %s19, 7
      %p58 = scmp.ne.s32.totalorder %s53, %s55
      %p59 = scmp.eq.s32.totalorder %s19, 0
      %p60 = por %p58, %p59
      %p61 = scmp.ne.s32.totalorder %s53, %s55
      %p62 = scmp.eq.s32.totalorder %s24, 7
      %p63 = por %p61, %p62
      %p64 = scmp.ne.s32.totalorder %s55, %s56
      %p65 = scmp.eq.s32.totalorder %s24, 0
      %p66 = por %p64, %p65
      %p67 = scmp.ne.s32.totalorder %s55, %s56
      %p68 = scmp.eq.s32.totalorder %s25, 7
      %p69 = por %p67, %p68
      %p71 = scmp.ne.s32.totalorder %s56, %s70
      %p72 = scmp.eq.s32.totalorder %s25, 0
      %p73 = por %p71, %p72
      %s75 = sadd.s32 %s74, 1
      %p78 = scmp.eq.s32.totalorder %s19, 7
      %p79 = scmp.ne.s32.totalorder %s74, %s76
      %p80 = scmp.eq.s32.totalorder %s19, 0
      %p81 = por %p79, %p80
      %p82 = scmp.ne.s32.totalorder %s74, %s76
      %p83 = scmp.eq.s32.totalorder %s24, 7
      %p84 = por %p82, %p83
      %p85 = scmp.ne.s32.totalorder %s76, %s77
      %p86 = scmp.eq.s32.totalorder %s24, 0
      %p87 = por %p85, %p86
      %p88 = scmp.ne.s32.totalorder %s76, %s77
      %p89 = scmp.eq.s32.totalorder %s25, 7
      %p90 = por %p88, %p89
      %p92 = scmp.ne.s32.totalorder %s77, %s91
      %p93 = scmp.eq.s32.totalorder %s25, 0
      %p94 = por %p92, %p93
      %s96 = sadd.s32 %s95, 1
      %p99 = scmp.eq.s32.totalorder %s19, 7
      %p100 = scmp.ne.s32.totalorder %s95, %s97
      %p101 = scmp.eq.s32.totalorder %s19, 0
      %p102 = por %p100, %p101
      %p103 = scmp.ne.s32.totalorder %s95, %s97
      %p104 = scmp.eq.s32.totalorder %s24, 7
      %p105 = por %p103, %p104
      %p106 = scmp.ne.s32.totalorder %s97, %s98
      %p107 = scmp.eq.s32.totalorder %s24, 0
      %p108 = por %p106, %p107
      %p109 = scmp.ne.s32.totalorder %s97, %s98
      %p110 = scmp.eq.s32.totalorder %s25, 7
      %p111 = por %p109, %p110
      %p113 = scmp.ne.s32.totalorder %s98, %s112
      %p114 = scmp.eq.s32.totalorder %s25, 0
      %p115 = por %p113, %p114
      %s117 = sadd.s32 %s116, 1
      %p120 = scmp.eq.s32.totalorder %s19, 7
      %p121 = scmp.ne.s32.totalorder %s116, %s118
      %p122 = scmp.eq.s32.totalorder %s19, 0
      %p123 = por %p121, %p122
      %p124 = scmp.ne.s32.totalorder %s116, %s118
      %p125 = scmp.eq.s32.totalorder %s24, 7
      %p126 = por %p124, %p125
      %p127 = scmp.ne.s32.totalorder %s118, %s119
      %p128 = scmp.eq.s32.totalorder %s24, 0
      %p129 = por %p127, %p128
      %p130 = scmp.ne.s32.totalorder %s118, %s119
      %p131 = scmp.eq.s32.totalorder %s25, 7
      %p132 = por %p130, %p131
      %p134 = scmp.ne.s32.totalorder %s119, %s133
      %p135 = scmp.eq.s32.totalorder %s25, 0
      %p136 = por %p134, %p135
      %s137 = ssub.s32 %s19, %s26
      %p138 = scmp.eq.s32.totalorder %s137, 0
      %s140 = sadd.s32 %s139, 1
      %s141 = scalar_select %p138, %s139, %s140
      %p144 = pneg %p138
      %p145 = scmp.eq.s32.totalorder %s19, 7
      %p146 = por %p144, %p145
      %p147 = scmp.ne.s32.totalorder %s139, %s142
      %p148 = scmp.eq.s32.totalorder %s19, 0
      %p149 = por %p147, %p148
      %p150 = scmp.ne.s32.totalorder %s139, %s142
      %p151 = scmp.eq.s32.totalorder %s24, 7
      %p152 = por %p150, %p151
      %p153 = scmp.ne.s32.totalorder %s142, %s143
      %p154 = scmp.eq.s32.totalorder %s24, 0
      %p155 = por %p153, %p154
      %p156 = scmp.ne.s32.totalorder %s142, %s143
      %p157 = scmp.eq.s32.totalorder %s25, 7
      %p158 = por %p156, %p157
      %p160 = scmp.ne.s32.totalorder %s143, %s159
      %p161 = scmp.eq.s32.totalorder %s25, 0
      %p162 = por %p160, %p161
      %p163 = scmp.le.s32.totalorder 1, %s19
      %p164 = scmp.lt.s32.totalorder %s19, 9
      %p165 = pnand %p163, %p164
      %p166 = pneg %p165
      // Predicated region
      $region9: #{tpu_custom_call.1} parent=5 // pred_check
        _
      $region10: #{tpu_custom_call.1} parent=5 // pred_check_branch
        %168 = sbr.rel (%p165) target = $region12
      $region11: #{tpu_custom_call.1} parent=5 // pred_region
        %s169 = ssub.s32 %s19, 1
        // Predicated region
        $region13: #{tpu_custom_call.1} parent=11 // pred_check
          %p170 = pneg %p66
        $region14: #{tpu_custom_call.1} parent=11 // pred_check_branch
          %172 = sbr.rel (%p170) target = $region16
        $region15: #{tpu_custom_call.1} parent=11 // pred_region
          %174 = vsyncadd [#allocation7], 0
          %s176 = sshll.u32 %s1, 4
          %s177 = int_to_ptr.hbm [resolvable:$true] %s176
          %s178 = sshll.u32 [#allocation6], 4
          %s179 = int_to_ptr.vmem [resolvable:$true] %s178
          %181 = dma.hbm_to_vmem [thread:$0]  %s177, 384, %s179, [#allocation7]
        $region16: #{tpu_custom_call.1} parent=11 // pred_fallthru
          _
        // Predicated region
        $region17: #{tpu_custom_call.1} parent=11 // pred_check
          %p182 = pneg %p87
        $region18: #{tpu_custom_call.1} parent=11 // pred_check_branch
          %184 = sbr.rel (%p182) target = $region20
        $region19: #{tpu_custom_call.1} parent=11 // pred_region
          %186 = vsyncadd [#allocation7], 0
          %s187 = sshll.u32 %s2, 4
          %s188 = int_to_ptr.hbm [resolvable:$true] %s187
          %s189 = sshll.u32 [#allocation8], 4
          %s190 = int_to_ptr.vmem [resolvable:$true] %s189
          %195 = dma.hbm_to_vmem [thread:$0]  %s188, 6144, %s190, [#allocation7], 384, 384, 24
        $region20: #{tpu_custom_call.1} parent=11 // pred_fallthru
          _
        // Predicated region
        $region21: #{tpu_custom_call.1} parent=11 // pred_check
          %p196 = pneg %p108
        $region22: #{tpu_custom_call.1} parent=11 // pred_check_branch
          %198 = sbr.rel (%p196) target = $region24
        $region23: #{tpu_custom_call.1} parent=11 // pred_region
          %200 = vsyncadd [#allocation10], 0
          %s202 = sshll.u32 %s3, 4
          %s203 = int_to_ptr.hbm [resolvable:$true] %s202
          %s204 = sshll.u32 [#allocation9], 4
          %s205 = int_to_ptr.vmem [resolvable:$true] %s204
          %207 = dma.hbm_to_vmem [thread:$0]  %s203, 48, %s205, [#allocation10]
        $region24: #{tpu_custom_call.1} parent=11 // pred_fallthru
          _
        // Predicated region
        $region25: #{tpu_custom_call.1} parent=11 // pred_check
          %p208 = pneg %p129
        $region26: #{tpu_custom_call.1} parent=11 // pred_check_branch
          %210 = sbr.rel (%p208) target = $region28
        $region27: #{tpu_custom_call.1} parent=11 // pred_region
          _
        $region28: #{tpu_custom_call.1} parent=11 // pred_fallthru
          _
      $region12: #{tpu_custom_call.1} parent=5 // pred_fallthru
        _
      %p211 = scmp.lt.s32.totalorder %s19, 8
      // Predicated region
      $region29: #{tpu_custom_call.1} parent=5 // pred_check
        %p212 = pneg %p211
      $region30: #{tpu_custom_call.1} parent=5 // pred_check_branch
        %214 = sbr.rel (%p212) target = $region32
      $region31: #{tpu_custom_call.1} parent=5 // pred_region
        // Predicated region
        $region33: #{tpu_custom_call.1} parent=31 // pred_check
          %p215 = pneg %p39
        $region34: #{tpu_custom_call.1} parent=31 // pred_check_branch
          %217 = sbr.rel (%p215) target = $region36
        $region35: #{tpu_custom_call.1} parent=31 // pred_region
          %s218 = sand.u32 %s29, 1
          %s219 = scalar_lea.sflag [#allocation4], %s218
          %s220 = sand.u32 %s29, 1
          %s221 = smul.addr %s220, 2
          %s222 = scalar_lea.vmem [#allocation3], %s221
          %224 = vsyncadd %s219, 0
          %s225 = smul.addr %s19, 2
          %s226 = scalar_lea.hbm %s0, %s225
          %s228 = sshll.u32 %s226, 4
          %s229 = int_to_ptr.hbm [resolvable:$true] %s228
          %s230 = sshll.u32 %s222, 4
          %s231 = int_to_ptr.vmem [resolvable:$true] %s230
          %233 = dma.hbm_to_vmem [thread:$0]  %s229, 32, %s231, %s219
        $region36: #{tpu_custom_call.1} parent=31 // pred_fallthru
          _
      $region32: #{tpu_custom_call.1} parent=5 // pred_fallthru
        _
      %p234 = scmp.le.s32.totalorder 1, %s19
      %p235 = scmp.lt.s32.totalorder %s19, 9
      %p236 = pnand %p234, %p235
      %p237 = pneg %p236
      // Predicated region
      $region37: #{tpu_custom_call.1} parent=5 // pred_check
        _
      $region38: #{tpu_custom_call.1} parent=5 // pred_check_branch
        %239 = sbr.rel (%p236) target = $region40
      $region39: #{tpu_custom_call.1} parent=5 // pred_region
        %s240 = ssub.s32 %s19, 1
        %s241 = sand.u32 %s32, 1
        %s242 = scalar_lea.sflag [#allocation4], %s241
        %s243 = sand.u32 %s32, 1
        %s244 = smul.addr %s243, 2
        %s245 = scalar_lea.vmem [#allocation3], %s244
        // Predicated region
        $region41: #{tpu_custom_call.1} parent=39 // pred_check
          %p246 = pneg %p45
        $region42: #{tpu_custom_call.1} parent=39 // pred_check_branch
          %248 = sbr.rel (%p246) target = $region44
        $region43: #{tpu_custom_call.1} parent=39 // pred_region
          %250 = dma.done %s242, 32
        $region44: #{tpu_custom_call.1} parent=39 // pred_fallthru
          _
        // Predicated region
        $region45: #{tpu_custom_call.1} parent=39 // pred_check
          %p251 = pneg %p66
        $region46: #{tpu_custom_call.1} parent=39 // pred_check_branch
          %253 = sbr.rel (%p251) target = $region48
        $region47: #{tpu_custom_call.1} parent=39 // pred_region
          %255 = dma.done [#allocation7], 384
        $region48: #{tpu_custom_call.1} parent=39 // pred_fallthru
          _
        // Predicated region
        $region49: #{tpu_custom_call.1} parent=39 // pred_check
          %p256 = pneg %p87
        $region50: #{tpu_custom_call.1} parent=39 // pred_check_branch
          %258 = sbr.rel (%p256) target = $region52
        $region51: #{tpu_custom_call.1} parent=39 // pred_region
          %260 = dma.done [#allocation7], 6144
        $region52: #{tpu_custom_call.1} parent=39 // pred_fallthru
          _
        // Predicated region
        $region53: #{tpu_custom_call.1} parent=39 // pred_check
          %p261 = pneg %p108
        $region54: #{tpu_custom_call.1} parent=39 // pred_check_branch
          %263 = sbr.rel (%p261) target = $region56
        $region55: #{tpu_custom_call.1} parent=39 // pred_region
          %265 = dma.done [#allocation10], 48
        $region56: #{tpu_custom_call.1} parent=39 // pred_fallthru
          _
        %s266 = sand.u32 %s32, 1
        %s267 = scalar_lea.sflag [#allocation4], %s266
        %s268 = sand.u32 %s32, 1
        %s269 = smul.addr %s268, 2
        %s270 = scalar_lea.vmem [#allocation3], %s269
        %p271 = pneg %p45
        %p272 = pneg %p42
        %p273 = pneg %p66
        %p274 = pneg %p63
        %p275 = pneg %p87
        %p276 = pneg %p84
        %p277 = pneg %p108
        %p278 = pneg %p105
        %p279 = pneg %p129
        %p280 = pneg %p126
        %p281 = pneg %p155
        %p282 = pneg %p152
        %s283 = sand.u32 %s142, 1
        %s284 = scalar_lea.sflag [#allocation5], %s283
        %s285 = sand.u32 %s142, 1
        %s286 = smul.addr %s285, 2
        %s287 = scalar_lea.vmem [#allocation11], %s286
        %p288 = scmp.eq.s32.totalorder %s24, 0
        // Predicated region
        $region57: #{tpu_custom_call.1} parent=39 // pred_check
          %p289 = pneg %p288
        $region58: #{tpu_custom_call.1} parent=39 // pred_check_branch
          %291 = sbr.rel (%p289) target = $region60
        $region59: #{tpu_custom_call.1} parent=39 // pred_region
          %292 = vst [vmem:[#allocation2] sm:$0x3] 0.0
        $region60: #{tpu_custom_call.1} parent=39 // pred_fallthru
          _
        %v293 = vld [vmem:[%s245] sm:$0x3]
        %v294 = vld [vmem:[#allocation2] sm:$0x3]
        %v295 = vld [vmem:[#allocation6] sm:$0xff]
        %v296 = vld [vmem:[#allocation6 + $0x8] sm:$0xff]
        %v297 = vld [vmem:[#allocation6 + $0x10] sm:$0xff]
        %v298 = vld [vmem:[#allocation9] sm:$0x7]
        %v300 = vperm.slane %v298, 0
        %v301 = vperm.slane %v298, 1
        %v302 = vperm.slane %v298, 2
        %vm306 = vcmask 64512
        %v308 = vsel %vm306, %v293, 0
        %310 = vmatpush.msra.mxu0 0.0
        %311 = vmatpush.msra.mxu0 0.0
        %312 = vmatpush.msra.mxu0 0.0
        %313 = vmatpush.msra.mxu0 0.0
        %314 = vmatpush.msra.mxu0 0.0
        %315 = vmatpush.msra.mxu0 0.0
        %316 = vmatpush.msra.mxu0 0.0
        %317 = vmatpush.msra.mxu0 0.0
        %318 = vmatpush.msra.mxu0 0.0
        %319 = vmatpush.msra.mxu0 0.0
        %320 = vmatpush.msra.mxu0 0.0
        %321 = vmatpush.msra.mxu0 0.0
        %322 = vmatpush.msra.mxu0 0.0
        %323 = vmatpush.msra.mxu0 0.0
        %324 = vmatpush.msra.mxu0 0.0
        %325 = vmatpush.msra.mxu0 %v295
        %326 = vmatmul.f32.gmra.mxu0 %v308
        %v327 = vpop.f32.mrf.mxu0
        %v328 = vadd.f32 %v300, %v327
        %329 = vdwg.mxu0
        %330 = vmatpush.msra.mxu0 0.0
        %331 = vmatpush.msra.mxu0 0.0
        %332 = vmatpush.msra.mxu0 0.0
        %333 = vmatpush.msra.mxu0 0.0
        %334 = vmatpush.msra.mxu0 0.0
        %335 = vmatpush.msra.mxu0 0.0
        %336 = vmatpush.msra.mxu0 0.0
        %337 = vmatpush.msra.mxu0 0.0
        %338 = vmatpush.msra.mxu0 0.0
        %339 = vmatpush.msra.mxu0 0.0
        %340 = vmatpush.msra.mxu0 0.0
        %341 = vmatpush.msra.mxu0 0.0
        %342 = vmatpush.msra.mxu0 0.0
        %343 = vmatpush.msra.mxu0 0.0
        %344 = vmatpush.msra.mxu0 0.0
        %345 = vmatpush.msra.mxu0 %v296
        %346 = vmatmul.f32.gmra.mxu0 %v308
        %v347 = vpop.f32.mrf.mxu0
        %v348 = vadd.f32 %v301, %v347
        %349 = vdwg.mxu0
        %350 = vmatpush.msra.mxu0 0.0
        %351 = vmatpush.msra.mxu0 0.0
        %352 = vmatpush.msra.mxu0 0.0
        %353 = vmatpush.msra.mxu0 0.0
        %354 = vmatpush.msra.mxu0 0.0
        %355 = vmatpush.msra.mxu0 0.0
        %356 = vmatpush.msra.mxu0 0.0
        %357 = vmatpush.msra.mxu0 0.0
        %358 = vmatpush.msra.mxu0 0.0
        %359 = vmatpush.msra.mxu0 0.0
        %360 = vmatpush.msra.mxu0 0.0
        %361 = vmatpush.msra.mxu0 0.0
        %362 = vmatpush.msra.mxu0 0.0
        %363 = vmatpush.msra.mxu0 0.0
        %364 = vmatpush.msra.mxu0 0.0
        %365 = vmatpush.msra.mxu0 %v297
        %366 = vmatmul.f32.gmra.mxu0 %v308
        %v367 = vpop.f32.mrf.mxu0
        %v368 = vadd.f32 %v302, %v367
        %369 = vdwg.mxu0
        %v370 = vld [vmem:[#allocation8] sm:$0xff]
        %v371 = vld [vmem:[#allocation8 + $0x8] sm:$0xff]
        %v372 = vld [vmem:[#allocation8 + $0x10] sm:$0xff]
        %v373 = vld [vmem:[#allocation8 + $0x18] sm:$0xff]
        %v374 = vld [vmem:[#allocation8 + $0x20] sm:$0xff]
        %v375 = vld [vmem:[#allocation8 + $0x28] sm:$0xff]
        %v376 = vld [vmem:[#allocation8 + $0x30] sm:$0xff]
        %v377 = vld [vmem:[#allocation8 + $0x38] sm:$0xff]
        %v378 = vld [vmem:[#allocation8 + $0x40] sm:$0xff]
        %v379 = vld [vmem:[#allocation8 + $0x48] sm:$0xff]
        %v380 = vld [vmem:[#allocation8 + $0x50] sm:$0xff]
        %v381 = vld [vmem:[#allocation8 + $0x58] sm:$0xff]
        %v382 = vld [vmem:[#allocation8 + $0x60] sm:$0xff]
        %v383 = vld [vmem:[#allocation8 + $0x68] sm:$0xff]
        %v384 = vld [vmem:[#allocation8 + $0x70] sm:$0xff]
        %v385 = vld [vmem:[#allocation8 + $0x78] sm:$0xff]
        %v386 = vld [vmem:[#allocation8 + $0x80] sm:$0xff]
        %v387 = vld [vmem:[#allocation8 + $0x88] sm:$0xff]
        %v388 = vld [vmem:[#allocation8 + $0x90] sm:$0xff]
        %v389 = vld [vmem:[#allocation8 + $0x98] sm:$0xff]
        %v390 = vld [vmem:[#allocation8 + $0xa0] sm:$0xff]
        %v391 = vld [vmem:[#allocation8 + $0xa8] sm:$0xff]
        %v392 = vld [vmem:[#allocation8 + $0xb0] sm:$0xff]
        %v393 = vld [vmem:[#allocation8 + $0xb8] sm:$0xff]
        %v394 = vld [vmem:[#allocation8 + $0xc0] sm:$0xff]
        %v395 = vld [vmem:[#allocation8 + $0xc8] sm:$0xff]
        %v396 = vld [vmem:[#allocation8 + $0xd0] sm:$0xff]
        %v397 = vld [vmem:[#allocation8 + $0xd8] sm:$0xff]
        %v398 = vld [vmem:[#allocation8 + $0xe0] sm:$0xff]
        %v399 = vld [vmem:[#allocation8 + $0xe8] sm:$0xff]
        %v400 = vld [vmem:[#allocation8 + $0xf0] sm:$0xff]
        %v401 = vld [vmem:[#allocation8 + $0xf8] sm:$0xff]
        %v402 = vld [vmem:[#allocation8 + $0x100] sm:$0xff]
        %v403 = vld [vmem:[#allocation8 + $0x108] sm:$0xff]
        %v404 = vld [vmem:[#allocation8 + $0x110] sm:$0xff]
        %v405 = vld [vmem:[#allocation8 + $0x118] sm:$0xff]
        %v406 = vld [vmem:[#allocation8 + $0x120] sm:$0xff]
        %v407 = vld [vmem:[#allocation8 + $0x128] sm:$0xff]
        %v408 = vld [vmem:[#allocation8 + $0x130] sm:$0xff]
        %v409 = vld [vmem:[#allocation8 + $0x138] sm:$0xff]
        %v410 = vld [vmem:[#allocation8 + $0x140] sm:$0xff]
        %v411 = vld [vmem:[#allocation8 + $0x148] sm:$0xff]
        %v412 = vld [vmem:[#allocation8 + $0x150] sm:$0xff]
        %v413 = vld [vmem:[#allocation8 + $0x158] sm:$0xff]
        %v414 = vld [vmem:[#allocation8 + $0x160] sm:$0xff]
        %v415 = vld [vmem:[#allocation8 + $0x168] sm:$0xff]
        %v416 = vld [vmem:[#allocation8 + $0x170] sm:$0xff]
        %v417 = vld [vmem:[#allocation8 + $0x178] sm:$0xff]
        %v418 = vld [vmem:[%s4] sm:$0x7]
        %v420 = vperm.slane %v418, 0
        %v421 = vperm.slane %v418, 1
        %v422 = vperm.slane %v418, 2
        %426 = vmatpush.msra.mxu0 %v415
        %427 = vmatpush.msra.mxu0 %v412
        %428 = vmatpush.msra.mxu0 %v409
        %429 = vmatpush.msra.mxu0 %v406
        %430 = vmatpush.msra.mxu0 %v403
        %431 = vmatpush.msra.mxu0 %v400
        %432 = vmatpush.msra.mxu0 %v397
        %433 = vmatpush.msra.mxu0 %v394
        %434 = vmatpush.msra.mxu0 %v391
        %435 = vmatpush.msra.mxu0 %v388
        %436 = vmatpush.msra.mxu0 %v385
        %437 = vmatpush.msra.mxu0 %v382
        %438 = vmatpush.msra.mxu0 %v379
        %439 = vmatpush.msra.mxu0 %v376
        %440 = vmatpush.msra.mxu0 %v373
        %441 = vmatpush.msra.mxu0 %v370
        %442 = vmatmul.f32.gmra.mxu0 %v294
        %v443 = vpop.f32.mrf.mxu0
        %v444 = vadd.f32 %v420, %v443
        %445 = vdwg.mxu0
        %446 = vmatpush.msra.mxu0 %v416
        %447 = vmatpush.msra.mxu0 %v413
        %448 = vmatpush.msra.mxu0 %v410
        %449 = vmatpush.msra.mxu0 %v407
        %450 = vmatpush.msra.mxu0 %v404
        %451 = vmatpush.msra.mxu0 %v401
        %452 = vmatpush.msra.mxu0 %v398
        %453 = vmatpush.msra.mxu0 %v395
        %454 = vmatpush.msra.mxu0 %v392
        %455 = vmatpush.msra.mxu0 %v389
        %456 = vmatpush.msra.mxu0 %v386
        %457 = vmatpush.msra.mxu0 %v383
        %458 = vmatpush.msra.mxu0 %v380
        %459 = vmatpush.msra.mxu0 %v377
        %460 = vmatpush.msra.mxu0 %v374
        %461 = vmatpush.msra.mxu0 %v371
        %462 = vmatmul.f32.gmra.mxu0 %v294
        %v463 = vpop.f32.mrf.mxu0
        %v464 = vadd.f32 %v421, %v463
        %465 = vdwg.mxu0
        %466 = vmatpush.msra.mxu0 %v417
        %467 = vmatpush.msra.mxu0 %v414
        %468 = vmatpush.msra.mxu0 %v411
        %469 = vmatpush.msra.mxu0 %v408
        %470 = vmatpush.msra.mxu0 %v405
        %471 = vmatpush.msra.mxu0 %v402
        %472 = vmatpush.msra.mxu0 %v399
        %473 = vmatpush.msra.mxu0 %v396
        %474 = vmatpush.msra.mxu0 %v393
        %475 = vmatpush.msra.mxu0 %v390
        %476 = vmatpush.msra.mxu0 %v387
        %477 = vmatpush.msra.mxu0 %v384
        %478 = vmatpush.msra.mxu0 %v381
        %479 = vmatpush.msra.mxu0 %v378
        %480 = vmatpush.msra.mxu0 %v375
        %481 = vmatpush.msra.mxu0 %v372
        %482 = vmatmul.f32.gmra.mxu0 %v294
        %v483 = vpop.f32.mrf.mxu0
        %v484 = vadd.f32 %v422, %v483
        %485 = vdwg.mxu0
        %v486 = vadd.f32 %v328, %v444
        %v487 = vxor.u32 %v486, 2147483648
        %v488 = vmul.f32 %v487, 1.442695
        %v489 = vpow.pop %v488
        %v490 = vadd.f32 %v489, 1.0
        %v491 = vrcp.pop %v490
        %v492 = vmul.f32 %v490, %v491
        %v493 = vsub.f32 1.0, %v492
        %v494 = vmul.f32 %v491, %v493
        %v495 = vadd.f32 %v491, %v494
        %vm496 = vweird.f32 %v490
        %vm497 = vweird.f32 %v491
        %vm498 = vmor %vm496, %vm497
        %v499 = vsel %vm498, %v491, %v495
        %v500 = vand.u32 2147483647, %v490
        %vm501 = vcmp.eq.f32.partialorder %v500, 8.507059e+37
        %v502 = vand.u32 %v490, 2147483648
        %v503 = vor.u32 1.1754944e-38, %v502
        %v504 = vsel %vm501, %v503, %v499
        %v505 = vmul.f32 1.0, %v504
        %v506 = vadd.f32 %v348, %v464
        %v507 = vxor.u32 %v506, 2147483648
        %v508 = vmul.f32 %v507, 1.442695
        %v509 = vpow.pop %v508
        %v510 = vadd.f32 %v509, 1.0
        %v511 = vrcp.pop %v510
        %v512 = vmul.f32 %v510, %v511
        %v513 = vsub.f32 1.0, %v512
        %v514 = vmul.f32 %v511, %v513
        %v515 = vadd.f32 %v511, %v514
        %vm516 = vweird.f32 %v510
        %vm517 = vweird.f32 %v511
        %vm518 = vmor %vm516, %vm517
        %v519 = vsel %vm518, %v511, %v515
        %v520 = vand.u32 2147483647, %v510
        %vm521 = vcmp.eq.f32.partialorder %v520, 8.507059e+37
        %v522 = vand.u32 %v510, 2147483648
        %v523 = vor.u32 1.1754944e-38, %v522
        %v524 = vsel %vm521, %v523, %v519
        %v525 = vmul.f32 1.0, %v524
        %v526 = vmul.f32 %v505, %v484
        %v527 = vadd.f32 %v368, %v526
        %v528 = vtanh.pop %v527
        %v529 = vsub.f32 1.0, %v525
        %v530 = vmul.f32 %v529, %v528
        %v531 = vmul.f32 %v525, %v294
        %v532 = vadd.f32 %v530, %v531
        %533 = vst [vmem:[#allocation2] sm:$0x3] %v532
        %534 = vst [vmem:[%s287] sm:$0x3] %v532
        %s535 = sand.u32 %s142, 1
        %s536 = scalar_lea.sflag [#allocation5], %s535
        %s537 = sand.u32 %s142, 1
        %s538 = smul.addr %s537, 2
        %s539 = scalar_lea.vmem [#allocation11], %s538
        // Predicated region
        $region61: #{tpu_custom_call.1} parent=39 // pred_check
          %p540 = pneg %p152
        $region62: #{tpu_custom_call.1} parent=39 // pred_check_branch
          %542 = sbr.rel (%p540) target = $region64
        $region63: #{tpu_custom_call.1} parent=39 // pred_region
          %544 = vsyncadd %s536, 0
          %s545 = smul.addr %s24, 2
          %s546 = scalar_lea.hbm %s5, %s545
          %s548 = sshll.u32 %s539, 4
          %s549 = int_to_ptr.vmem [resolvable:$true] %s548
          %s550 = sshll.u32 %s546, 4
          %s551 = int_to_ptr.hbm [resolvable:$true] %s550
          %553 = dma.vmem_to_hbm [thread:$0]  %s549, 32, %s551, %s536
        $region64: #{tpu_custom_call.1} parent=39 // pred_fallthru
          _
      $region40: #{tpu_custom_call.1} parent=5 // pred_fallthru
        _
      %p554 = scmp.le.s32.totalorder 2, %s19
      // Predicated region
      $region65: #{tpu_custom_call.1} parent=5 // pred_check
        %p555 = pneg %p554
      $region66: #{tpu_custom_call.1} parent=5 // pred_check_branch
        %557 = sbr.rel (%p555) target = $region68
      $region67: #{tpu_custom_call.1} parent=5 // pred_region
        %s558 = ssub.s32 %s19, 2
        // Predicated region
        $region69: #{tpu_custom_call.1} parent=67 // pred_check
          %p559 = pneg %p158
        $region70: #{tpu_custom_call.1} parent=67 // pred_check_branch
          %561 = sbr.rel (%p559) target = $region72
        $region71: #{tpu_custom_call.1} parent=67 // pred_region
          %s562 = sand.u32 %s143, 1
          %s563 = scalar_lea.sflag [#allocation5], %s562
          %s564 = sand.u32 %s143, 1
          %s565 = smul.addr %s564, 2
          %s566 = scalar_lea.vmem [#allocation11], %s565
          %568 = dma.done %s563, 32
        $region72: #{tpu_custom_call.1} parent=67 // pred_fallthru
          _
      $region68: #{tpu_custom_call.1} parent=5 // pred_fallthru
        _
    $region6: #{tpu_custom_call.1} parent=1 // loop_footer
      %s23 = sadd.s32 1, %s19
    $region7: #{tpu_custom_call.1} parent=1 // loop_footer_branch
      %18 = sbr.rel target = $region3
    $region8: #{tpu_custom_call.1} parent=1 // loop_exit
      _
    %569 = vsyncpa [#allocation4], 1
    %s570 = scalar_lea.sflag [#allocation4], 1
    %571 = vsyncpa %s570, 1
    %572 = vsyncpa [#allocation7], 1
    %573 = vsyncpa [#allocation10], 1
    %574 = vsyncpa [#allocation5], 1
    %s575 = scalar_lea.sflag [#allocation5], 1
    %576 = vsyncpa %s575, 1

</llo_original>
